<compile_context>
chip_gen: v6e
topology: v6e:2x2x1
jax: 0.10.0
libtpu: 0.0.40
codegen_flags: <defaults>
</compile_context>

<pallas_src>
import functools

import jax
import jax.numpy as jnp
from jax.experimental import pallas as pl
from jax.experimental.pallas import tpu as pltpu

NEG_SLOPE = 0.01  # PyTorch LeakyReLU default


# --------------------------------------------------------------------------
# Kernel
# --------------------------------------------------------------------------
def fusion_kernel(x_ref, y_ref,
                  w1_ref, w2_ref, w3_ref,
                  b1_ref, b2_ref, b3_ref,
                  o_ref, *, hidden, chunk, n_chunks):
    """x_ref/y_ref: (1, Cin, ts) f32.  Weights bf16, biases f32.
    w1: block_diag(Wx, Wy) (2h, 2Cin); w2: block_diag(Wx1, Wy1) (2h, 2h);
    w3: Wx2 (out_f, h).  b1=[bx;by], b2=[bx1;by1], b3=bx2."""
    f32 = jnp.float32
    cdt = w1_ref.dtype                                    # matmul operand dtype

    w1, w2, w3 = w1_ref[...], w2_ref[...], w3_ref[...]
    b1, b2, b3 = b1_ref[...], b2_ref[...], b3_ref[...]

    def compute(x, y):
        # x, y: (Cin, chunk) f32 -> cast in VMEM (inputs stay f32 in HBM)
        xy = jnp.concatenate([x, y], axis=0).astype(cdt)            # (2Cin, c)

        # stage 1: one block-diag matmul -> [x1 ; y1]
        h1 = jnp.dot(w1, xy, preferred_element_type=f32) + b1       # (2h, c)
        h1 = jnp.maximum(h1, NEG_SLOPE * h1)                        # leaky
        y1 = h1[hidden:]
        s = h1[:hidden] + y1

        # stage 2: one block-diag matmul over [s ; y1] -> [x2 ; y2]
        sy = jnp.concatenate([s, y1], axis=0).astype(cdt)           # (2h, c)
        h2 = jnp.dot(w2, sy, preferred_element_type=f32) + b2       # (2h, c)
        h2 = jnp.maximum(h2, NEG_SLOPE * h2)
        s2 = (h2[:hidden] + h2[hidden:]).astype(cdt)                # (h, c)

        # stage 3 (no activation)
        return jnp.dot(w3, s2, preferred_element_type=f32) + b3     # (out_f, c)

    if n_chunks == 1:
        o_ref[0] = compute(x_ref[0], y_ref[0]).astype(o_ref.dtype)
    else:
        # chunk the lane dim so intermediates die per chunk (vreg pressure)
        def body(c, carry):
            off = pl.multiple_of(c * chunk, 128)
            out = compute(x_ref[0, :, pl.ds(off, chunk)],
                          y_ref[0, :, pl.ds(off, chunk)])
            o_ref[0, :, pl.ds(off, chunk)] = out.astype(o_ref.dtype)
            return carry

        jax.lax.fori_loop(0, n_chunks, body, 0, unroll=True)


# --------------------------------------------------------------------------
# Tiling heuristics
# --------------------------------------------------------------------------
def _pick_spatial_tile(S, N, *, target=2048, min_steps=4):
    """Large lane-dense spatial tile (multiple of 128, or the full S),
    shrunk only as needed so the parallel grid has >= min_steps steps
    (keeps both v7x TensorCores busy; v5e/v6e keep the large tile)."""
    if S <= 128:
        return S
    cands = []
    if S <= target:
        cands.append(S)                         # full dim (always legal)
    top = (min(target, S) // 128) * 128
    cands += list(range(top, 127, -128))        # multiples of 128

    def key(ts):
        steps = N * (-(-S // ts))
        exact = (ts == S) or (S % ts == 0)      # prefer no ragged tail
        return (min(steps, min_steps), exact, ts)

    return max(cands, key=key)


def _pick_chunk(ts, *, max_chunk=256):
    """In-kernel lane chunk (bounds vreg pressure inside one grid step)."""
    if ts <= max_chunk:
        return ts
    if ts % 256 == 0:
        return 256
    if ts % 128 == 0:
        return 128
    return ts                                   # ragged full-S tile: no chunking


# --------------------------------------------------------------------------
# One-time weight/bias prepacking (hoisted out of the per-call path)
# --------------------------------------------------------------------------
def _block_diag(a, b):
    za = jnp.zeros((a.shape[0], b.shape[1]), a.dtype)
    zb = jnp.zeros((b.shape[0], a.shape[1]), b.dtype)
    top = jnp.concatenate([a, za], axis=1)
    bot = jnp.concatenate([zb, b], axis=1)
    return jnp.concatenate([top, bot], axis=0)


def prepack_params(p, compute_dtype=jnp.bfloat16):
    """Pack the 10 conv weights/biases into 6 arrays, once, reused per call."""
    hidden = p["wx"].shape[0]
    in_f = p["wx"].shape[1]
    out_f = p["wx2"].shape[0]
    packed = {
        "w1": _block_diag(p["wx"], p["wy"]).astype(compute_dtype),     # (2h, 2Cin)
        "w2": _block_diag(p["wx1"], p["wy1"]).astype(compute_dtype),   # (2h, 2h)
        "w3": p["wx2"].astype(compute_dtype),                          # (out_f, h)
        "b1": jnp.concatenate([p["bx"], p["by"]], 0).astype(jnp.float32),
        "b2": jnp.concatenate([p["bx1"], p["by1"]], 0).astype(jnp.float32),
        "b3": p["bx2"].astype(jnp.float32),
        "hidden": hidden, "in_f": in_f, "out_f": out_f,
    }
    return packed


# --------------------------------------------------------------------------
# Forward
# --------------------------------------------------------------------------
def fusion_forward(x_nchw, y_nchw, packed, *,
                   spatial_tile=2048, out_dtype=jnp.float32):
    """x, y: (N, in_f, H, W) float32 (NCHW).  Returns (N, out_f, H, W)."""
    N, Cin, H, W = x_nchw.shape
    S = H * W
    hidden = packed["hidden"]
    out_f = packed["out_f"]
    assert Cin == packed["in_f"]

    ts = _pick_spatial_tile(S, N, target=spatial_tile)
    chunk = _pick_chunk(ts)
    assert ts % chunk == 0
    n_chunks = ts // chunk
    grid = (N, pl.cdiv(S, ts))

    # free reshapes (spatial already contiguous in NCHW); inputs stay f32
    xf = x_nchw.reshape(N, Cin, S)
    yf = y_nchw.reshape(N, Cin, S)

    act_spec = pl.BlockSpec((1, Cin, ts), lambda n, j: (n, 0, j))
    out_spec = pl.BlockSpec((1, out_f, ts), lambda n, j: (n, 0, j))

    def const_spec(shape):
        # block-invariant constants: Pallas fetches them once (constant index_map)
        return pl.BlockSpec(shape, lambda n, j: tuple(0 for _ in shape))

    kernel = functools.partial(fusion_kernel, hidden=hidden,
                               chunk=chunk, n_chunks=n_chunks)

    # advisory cost estimate for XLA scheduling around the custom call
    flops = 2 * N * S * (2 * hidden * Cin + 2 * hidden * hidden + out_f * hidden)
    w_bytes = sum(int(packed[k].size) * packed[k].dtype.itemsize
                  for k in ("w1", "w2", "w3", "b1", "b2", "b3"))
    bytes_accessed = (2 * N * Cin * S * 4
                      + N * out_f * S * jnp.dtype(out_dtype).itemsize
                      + w_bytes)

    out = pl.pallas_call(
        kernel,
        out_shape=jax.ShapeDtypeStruct((N, out_f, S), out_dtype),
        grid_spec=pltpu.PrefetchScalarGridSpec(
            num_scalar_prefetch=0,
            grid=grid,
            in_specs=[
                act_spec, act_spec,
                const_spec(packed["w1"].shape),
                const_spec(packed["w2"].shape),
                const_spec(packed["w3"].shape),
                const_spec(packed["b1"].shape),
                const_spec(packed["b2"].shape),
                const_spec(packed["b3"].shape),
            ],
            out_specs=out_spec,
        ),
        compiler_params=pltpu.CompilerParams(
            dimension_semantics=("parallel", "parallel")),
        cost_estimate=pl.CostEstimate(flops=int(flops), transcendentals=0,
                                      bytes_accessed=int(bytes_accessed)),
    )(xf, yf, packed["w1"], packed["w2"], packed["w3"],
      packed["b1"], packed["b2"], packed["b3"])

    return out.reshape(N, out_f, H, W)


# --------------------------------------------------------------------------
# Synthetic params + pure-JAX reference (matches kernel bf16-operand numerics)
# --------------------------------------------------------------------------
def init_params(key, in_f, hidden, out_f):
    """Weights as (C_out, C_in) (PyTorch Conv2d 1x1 squeezed); biases (C_out, 1)."""
    ks = jax.random.split(key, 10)
    scale = 0.05

    def w(k, shape):
        return scale * jax.random.normal(k, shape, dtype=jnp.float32)

    return {
        "wx": w(ks[0], (hidden, in_f)),    "bx": w(ks[1], (hidden, 1)),
        "wy": w(ks[2], (hidden, in_f)),    "by": w(ks[3], (hidden, 1)),
        "wx1": w(ks[4], (hidden, hidden)), "bx1": w(ks[5], (hidden, 1)),
        "wy1": w(ks[6], (hidden, hidden)), "by1": w(ks[7], (hidden, 1)),
        "wx2": w(ks[8], (out_f, hidden)),  "bx2": w(ks[9], (out_f, 1)),
    }


def _leaky(v):
    return jnp.maximum(v, NEG_SLOPE * v)


def fusion_reference(x_nchw, y_nchw, p, *, compute_dtype=jnp.bfloat16):
    N, Cin, H, W = x_nchw.shape
    f32 = jnp.float32
    xf = x_nchw.reshape(N, Cin, H * W).astype(compute_dtype)
    yf = y_nchw.reshape(N, Cin, H * W).astype(compute_dtype)

    def conv(w, b, v):
        return jnp.einsum("oc,ncs->nos", w.astype(compute_dtype), v,
                          preferred_element_type=f32) + b.astype(f32)[None]

    x1 = _leaky(conv(p["wx"], p["bx"], xf))
    y1 = _leaky(conv(p["wy"], p["by"], yf))
    s = (x1 + y1).astype(compute_dtype)
    x2 = _leaky(conv(p["wx1"], p["bx1"], s))
    y2 = _leaky(conv(p["wy1"], p["by1"], y1.astype(compute_dtype)))
    s2 = (x2 + y2).astype(compute_dtype)
    out = conv(p["wx2"], p["bx2"], s2)
    out_f = p["wx2"].shape[0]
    return out.reshape(N, out_f, H, W)


if __name__ == "__main__":
    # Small shapes consistent with the module (in_f -> hidden -> out_f, 1x1 convs)
    N, in_f, H, W = 2, 32, 16, 16     # S = 256
    hidden, out_f = 64, 64

    key = jax.random.PRNGKey(0)
    kx, ky, kp = jax.random.split(key, 3)
    x = jax.random.normal(kx, (N, in_f, H, W), dtype=jnp.float32)
    y = jax.random.normal(ky, (N, in_f, H, W), dtype=jnp.float32)
    params = init_params(kp, in_f, hidden, out_f)

    packed = prepack_params(params)            # one-time prepack, reused per call
    out = fusion_forward(x, y, packed)
    out = jax.block_until_ready(out)

    ref = fusion_reference(x, y, params)
    assert out.shape == (N, out_f, H, W)
    # bf16 matmul operands (f32 accumulation) -> relaxed tolerance
    assert jnp.allclose(out, ref, atol=2e-2, rtol=2e-2), \
        float(jnp.max(jnp.abs(out - ref)))

    print("KERNEL_OK")
</pallas_src>

<mosaic_0001>
module attributes {stable_mosaic.version = 11 : i64} {
  func.func @fusion_kernel(%arg0: i32, %arg1: i32, %arg2: memref<1x32x128xf32, #tpu.memory_space<vmem>>, %arg3: memref<1x32x128xf32, #tpu.memory_space<vmem>>, %arg4: memref<128x64xbf16, #tpu.memory_space<vmem>>, %arg5: memref<128x128xbf16, #tpu.memory_space<vmem>>, %arg6: memref<64x64xbf16, #tpu.memory_space<vmem>>, %arg7: memref<128x1xf32, #tpu.memory_space<vmem>>, %arg8: memref<128x1xf32, #tpu.memory_space<vmem>>, %arg9: memref<64x1xf32, #tpu.memory_space<vmem>>, %arg10: memref<1x64x128xf32, #tpu.memory_space<vmem>>) attributes {dimension_semantics = [#tpu.dimension_semantics<parallel>, #tpu.dimension_semantics<parallel>], iteration_bounds = array<i64: 2, 2>, scalar_prefetch = 0 : i64, scratch_operands = 0 : i64, tpu.core_type = #tpu.core_type<tc>, window_params = [{transform_indices = @transform_0, window_bounds = array<i64: 1, 32, 128>}, {transform_indices = @transform_1, window_bounds = array<i64: 1, 32, 128>}, {pipeline_mode = #tpu.pipeline_mode<synchronous>, transform_indices = @transform_2, window_bounds = array<i64: 128, 64>}, {pipeline_mode = #tpu.pipeline_mode<synchronous>, transform_indices = @transform_3, window_bounds = array<i64: 128, 128>}, {pipeline_mode = #tpu.pipeline_mode<synchronous>, transform_indices = @transform_4, window_bounds = array<i64: 64, 64>}, {pipeline_mode = #tpu.pipeline_mode<synchronous>, transform_indices = @transform_5, window_bounds = array<i64: 128, 1>}, {pipeline_mode = #tpu.pipeline_mode<synchronous>, transform_indices = @transform_6, window_bounds = array<i64: 128, 1>}, {pipeline_mode = #tpu.pipeline_mode<synchronous>, transform_indices = @transform_7, window_bounds = array<i64: 64, 1>}, {transform_indices = @transform_8, window_bounds = array<i64: 1, 64, 128>}]} {
    %c0 = arith.constant 0 : index
    %c0_0 = arith.constant 0 : index
    %0 = vector.load %arg4[%c0, %c0_0] : memref<128x64xbf16, #tpu.memory_space<vmem>>, vector<128x64xbf16>
    %c0_1 = arith.constant 0 : index
    %c0_2 = arith.constant 0 : index
    %1 = vector.load %arg5[%c0_1, %c0_2] : memref<128x128xbf16, #tpu.memory_space<vmem>>, vector<128x128xbf16>
    %c0_3 = arith.constant 0 : index
    %c0_4 = arith.constant 0 : index
    %2 = vector.load %arg6[%c0_3, %c0_4] : memref<64x64xbf16, #tpu.memory_space<vmem>>, vector<64x64xbf16>
    %c0_5 = arith.constant 0 : index
    %c0_6 = arith.constant 0 : index
    %3 = vector.load %arg7[%c0_5, %c0_6] : memref<128x1xf32, #tpu.memory_space<vmem>>, vector<128x1xf32>
    %c0_7 = arith.constant 0 : index
    %c0_8 = arith.constant 0 : index
    %4 = vector.load %arg8[%c0_7, %c0_8] : memref<128x1xf32, #tpu.memory_space<vmem>>, vector<128x1xf32>
    %c0_9 = arith.constant 0 : index
    %c0_10 = arith.constant 0 : index
    %5 = vector.load %arg9[%c0_9, %c0_10] : memref<64x1xf32, #tpu.memory_space<vmem>>, vector<64x1xf32>
    %c0_11 = arith.constant 0 : index
    %c0_12 = arith.constant 0 : index
    %c0_13 = arith.constant 0 : index
    %6 = vector.load %arg2[%c0_11, %c0_12, %c0_13] : memref<1x32x128xf32, #tpu.memory_space<vmem>>, vector<1x32x128xf32>
    %7 = vector.shape_cast %6 : vector<1x32x128xf32> to vector<32x128xf32>
    %c0_14 = arith.constant 0 : index
    %c0_15 = arith.constant 0 : index
    %c0_16 = arith.constant 0 : index
    %8 = vector.load %arg3[%c0_14, %c0_15, %c0_16] : memref<1x32x128xf32, #tpu.memory_space<vmem>>, vector<1x32x128xf32>
    %9 = vector.shape_cast %8 : vector<1x32x128xf32> to vector<32x128xf32>
    %10 = tpu.concatenate %7, %9 in 0 : vector<32x128xf32>, vector<32x128xf32> -> vector<64x128xf32>
    %11 = arith.truncf %10 : vector<64x128xf32> to vector<64x128xbf16>
    %cst = arith.constant dense<0.000000e+00> : vector<128x128xf32>
    %12 = tpu.matmul %0, %11, %cst {dimension_numbers = #tpu.dot_dimension_numbers<[1], [0], [0], [1], [0, 0, 1, 1], [], []>} : vector<128x64xbf16>, vector<64x128xbf16>, vector<128x128xf32> -> vector<128x128xf32>
    %13 = vector.broadcast %3 : vector<128x1xf32> to vector<128x128xf32>
    %14 = arith.addf %12, %13 : vector<128x128xf32>
    %cst_17 = arith.constant 0.00999999977 : f32
    %15 = vector.broadcast %cst_17 : f32 to vector<128x128xf32>
    %16 = arith.mulf %15, %14 : vector<128x128xf32>
    %17 = arith.maximumf %14, %16 : vector<128x128xf32>
    %18 = vector.extract_strided_slice %17 {offsets = [64, 0], sizes = [64, 128], strides = [1, 1]} : vector<128x128xf32> to vector<64x128xf32>
    %19 = vector.extract_strided_slice %17 {offsets = [0, 0], sizes = [64, 128], strides = [1, 1]} : vector<128x128xf32> to vector<64x128xf32>
    %20 = arith.addf %19, %18 : vector<64x128xf32>
    %21 = tpu.concatenate %20, %18 in 0 : vector<64x128xf32>, vector<64x128xf32> -> vector<128x128xf32>
    %22 = arith.truncf %21 : vector<128x128xf32> to vector<128x128xbf16>
    %cst_18 = arith.constant dense<0.000000e+00> : vector<128x128xf32>
    %23 = tpu.matmul %1, %22, %cst_18 {dimension_numbers = #tpu.dot_dimension_numbers<[1], [0], [0], [1], [0, 0, 1, 1], [], []>} : vector<128x128xbf16>, vector<128x128xbf16>, vector<128x128xf32> -> vector<128x128xf32>
    %24 = vector.broadcast %4 : vector<128x1xf32> to vector<128x128xf32>
    %25 = arith.addf %23, %24 : vector<128x128xf32>
    %cst_19 = arith.constant 0.00999999977 : f32
    %26 = vector.broadcast %cst_19 : f32 to vector<128x128xf32>
    %27 = arith.mulf %26, %25 : vector<128x128xf32>
    %28 = arith.maximumf %25, %27 : vector<128x128xf32>
    %29 = vector.extract_strided_slice %28 {offsets = [0, 0], sizes = [64, 128], strides = [1, 1]} : vector<128x128xf32> to vector<64x128xf32>
    %30 = vector.extract_strided_slice %28 {offsets = [64, 0], sizes = [64, 128], strides = [1, 1]} : vector<128x128xf32> to vector<64x128xf32>
    %31 = arith.addf %29, %30 : vector<64x128xf32>
    %32 = arith.truncf %31 : vector<64x128xf32> to vector<64x128xbf16>
    %cst_20 = arith.constant dense<0.000000e+00> : vector<64x128xf32>
    %33 = tpu.matmul %2, %32, %cst_20 {dimension_numbers = #tpu.dot_dimension_numbers<[1], [0], [0], [1], [0, 0, 1, 1], [], []>} : vector<64x64xbf16>, vector<64x128xbf16>, vector<64x128xf32> -> vector<64x128xf32>
    %34 = vector.broadcast %5 : vector<64x1xf32> to vector<64x128xf32>
    %35 = arith.addf %33, %34 : vector<64x128xf32>
    %c0_21 = arith.constant 0 : index
    %c0_22 = arith.constant 0 : index
    %c0_23 = arith.constant 0 : index
    %36 = vector.load %arg10[%c0_21, %c0_22, %c0_23] : memref<1x64x128xf32, #tpu.memory_space<vmem>>, vector<1x64x128xf32>
    %37 = vector.shape_cast %36 : vector<1x64x128xf32> to vector<64x128xf32>
    %38 = vector.shape_cast %35 : vector<64x128xf32> to vector<1x64x128xf32>
    tpu.vector_store %arg10[%c0_21, %c0_22, %c0_23], %38 {strides = array<i32>} : memref<1x64x128xf32, #tpu.memory_space<vmem>>, vector<1x64x128xf32>,
    return
  }
  func.func @transform_0(%arg0: i32, %arg1: i32) -> (i32, i32, i32) {
    %c0_i32 = arith.constant 0 : i32
    %c0_i32_0 = arith.constant 0 : i32
    return %arg0, %c0_i32, %arg1 : i32, i32, i32
  }
  func.func @transform_1(%arg0: i32, %arg1: i32) -> (i32, i32, i32) {
    %c0_i32 = arith.constant 0 : i32
    %c0_i32_0 = arith.constant 0 : i32
    return %arg0, %c0_i32, %arg1 : i32, i32, i32
  }
  func.func @transform_2(%arg0: i32, %arg1: i32) -> (i32, i32) {
    %c0_i32 = arith.constant 0 : i32
    %c0_i32_0 = arith.constant 0 : i32
    %c0_i32_1 = arith.constant 0 : i32
    return %c0_i32, %c0_i32_0 : i32, i32
  }
  func.func @transform_3(%arg0: i32, %arg1: i32) -> (i32, i32) {
    %c0_i32 = arith.constant 0 : i32
    %c0_i32_0 = arith.constant 0 : i32
    %c0_i32_1 = arith.constant 0 : i32
    return %c0_i32, %c0_i32_0 : i32, i32
  }
  func.func @transform_4(%arg0: i32, %arg1: i32) -> (i32, i32) {
    %c0_i32 = arith.constant 0 : i32
    %c0_i32_0 = arith.constant 0 : i32
    %c0_i32_1 = arith.constant 0 : i32
    return %c0_i32, %c0_i32_0 : i32, i32
  }
  func.func @transform_5(%arg0: i32, %arg1: i32) -> (i32, i32) {
    %c0_i32 = arith.constant 0 : i32
    %c0_i32_0 = arith.constant 0 : i32
    %c0_i32_1 = arith.constant 0 : i32
    return %c0_i32, %c0_i32_0 : i32, i32
  }
  func.func @transform_6(%arg0: i32, %arg1: i32) -> (i32, i32) {
    %c0_i32 = arith.constant 0 : i32
    %c0_i32_0 = arith.constant 0 : i32
    %c0_i32_1 = arith.constant 0 : i32
    return %c0_i32, %c0_i32_0 : i32, i32
  }
  func.func @transform_7(%arg0: i32, %arg1: i32) -> (i32, i32) {
    %c0_i32 = arith.constant 0 : i32
    %c0_i32_0 = arith.constant 0 : i32
    %c0_i32_1 = arith.constant 0 : i32
    return %c0_i32, %c0_i32_0 : i32, i32
  }
  func.func @transform_8(%arg0: i32, %arg1: i32) -> (i32, i32, i32) {
    %c0_i32 = arith.constant 0 : i32
    %c0_i32_0 = arith.constant 0 : i32
    return %arg0, %c0_i32, %arg1 : i32, i32, i32
  }
}

</mosaic_0001>

<llo_original>
// kernel: tpu_custom_call.1
$region0: #{tpu_custom_call.1}
  #allocation0 [shape = 'u32[]', space=smem, size = 0x4, offset = 0x4, fixed_abs, tag = 'smem constant byte address 0x4 - core index']
  #allocation1 [shape = 'u32[144,128]{1,0:T(1,128)}', space=vmem, size = 0x12000, scoped, tag = 'internal scratch']
  %s0 = inlined_call_operand.vmem [shape: f32[2,32,256], index: 0, kind: input, shape index: {}]
  %s1 = inlined_call_operand.vmem [shape: f32[2,32,256], index: 1, kind: input, shape index: {}]
  %s2 = inlined_call_operand.vmem [shape: bf16[128,64], index: 2, kind: input, shape index: {}]
  %s3 = inlined_call_operand.vmem [shape: bf16[128,128], index: 3, kind: input, shape index: {}]
  %s4 = inlined_call_operand.vmem [shape: bf16[64,64], index: 4, kind: input, shape index: {}]
  %s5 = inlined_call_operand.vmem [shape: f32[128,1], index: 5, kind: input, shape index: {}]
  %s6 = inlined_call_operand.vmem [shape: f32[128,1], index: 6, kind: input, shape index: {}]
  %s7 = inlined_call_operand.vmem [shape: f32[64,1], index: 7, kind: input, shape index: {}]
  %s8 = inlined_call_operand.hbm [shape: f32[2,64,256], index: 8, kind: output, shape index: {}]
  %s9 = sld [smem:[#allocation0]]
  $region141: #{tpu_custom_call.1} parent=0
    _
  %s11 = ssub.s32 1, %s9
  %s12 = scalar_select 0, %s11, %s9
  $region1: #{tpu_custom_call.1} parent=0
    #allocation2 [shape = 'u8[32768]{0}', space=vmem, size = 0x8000, scoped, tag = 'input window, operand 0']
    #allocation3 [shape = 'u8[32768]{0}', space=vmem, size = 0x8000, scoped, tag = 'input window, operand 1']
    #allocation4 [shape = 'u8[65536]{0}', space=vmem, size = 0x10000, scoped, tag = 'output window, operand 0']
    #allocation5 [shape = 's32[2]{0}', space=sflag, size = 0x8, scoped, tag = 'scoped memory for tpu_custom_call.1']
    %13 = vsyncpa [#allocation5], 0
    %s14 = scalar_lea.sflag [#allocation5], 1
    %15 = vsyncpa %s14, 0
    loop: start=0, step=1, limit=6
    $region2: #{tpu_custom_call.1} parent=1 // loop_pre_header
      _
    $region3: #{tpu_custom_call.1} parent=1 // loop_header
      %s17 = sphi 0, %s21
      %p18 = scmp.ge.s32.totalorder %s17, 6
      %s24 = sphi 0, %s36
      %s25 = sphi 0, %s32
      %s26 = sphi 0, %s24
      %s27 = sphi 0, %s25
      %s28 = sphi 0, %s26
      %s29 = sphi 0, %s27
      %s41 = sphi 0, %s43
      %s44 = sphi 0, %s41
      %s45 = sphi 0, %s44
      %s61 = sphi 0, %s45
      %s69 = sphi 0, %s71
      %s72 = sphi 0, %s69
      %s73 = sphi 0, %s72
      %s89 = sphi 0, %s73
      %s93 = sphi 0, %s93
      %s95 = sphi 0, %s93
      %s96 = sphi 0, %s95
      %s110 = sphi 0, %s96
      %s114 = sphi 0, %s114
      %s116 = sphi 0, %s114
      %s117 = sphi 0, %s116
      %s131 = sphi 0, %s117
      %s135 = sphi 0, %s135
      %s137 = sphi 0, %s135
      %s138 = sphi 0, %s137
      %s152 = sphi 0, %s138
      %s156 = sphi 0, %s156
      %s158 = sphi 0, %s156
      %s159 = sphi 0, %s158
      %s173 = sphi 0, %s159
      %s177 = sphi 0, %s177
      %s179 = sphi 0, %s177
      %s180 = sphi 0, %s179
      %s194 = sphi 0, %s180
      %s198 = sphi 0, %s198
      %s200 = sphi 0, %s198
      %s201 = sphi 0, %s200
      %s215 = sphi 0, %s201
      %s223 = sphi 0, %s225
      %s226 = sphi 0, %s223
      %s227 = sphi 0, %s226
      %s243 = sphi 0, %s227
    $region4: #{tpu_custom_call.1} parent=1 // loop_header_branch
      %20 = sbr.rel (%p18) target = $region8
    $region5: #{tpu_custom_call.1} parent=1 // loop_body
      %s22 = ssub.s32 %s17, 1
      %s23 = ssub.s32 %s17, 2
      %s30 = sadd.s32 1, %s25
      %p31 = scmp.ge.s32.totalorder %s30, 2
      %s32 = scalar_select %p31, 0, %s30
      %s33 = sadd.s32 1, %s24
      %s34 = scalar_select %p31, %s33, %s24
      %p35 = scmp.ge.s32.totalorder %s34, 2
      %s36 = scalar_select %p35, 0, %s34
      %s37 = ssub.s32 %s24, %s36
      %s38 = ssub.s32 %s25, %s32
      %s39 = sor.u32 %s37, %s38
      %p40 = scmp.eq.s32.totalorder %s39, 0
      %s42 = sadd.s32 %s41, 1
      %s43 = scalar_select %p40, %s41, %s42
      %p46 = pneg %p40
      %p47 = scmp.eq.s32.totalorder %s17, 3
      %p48 = por %p46, %p47
      %p49 = scmp.ne.s32.totalorder %s41, %s44
      %p50 = scmp.eq.s32.totalorder %s17, 0
      %p51 = por %p49, %p50
      %p52 = scmp.ne.s32.totalorder %s41, %s44
      %p53 = scmp.eq.s32.totalorder %s22, 3
      %p54 = por %p52, %p53
      %p55 = scmp.ne.s32.totalorder %s44, %s45
      %p56 = scmp.eq.s32.totalorder %s22, 0
      %p57 = por %p55, %p56
      %p58 = scmp.ne.s32.totalorder %s44, %s45
      %p59 = scmp.eq.s32.totalorder %s23, 3
      %p60 = por %p58, %p59
      %p62 = scmp.ne.s32.totalorder %s45, %s61
      %p63 = scmp.eq.s32.totalorder %s23, 0
      %p64 = por %p62, %p63
      %s65 = ssub.s32 %s24, %s36
      %s66 = ssub.s32 %s25, %s32
      %s67 = sor.u32 %s65, %s66
      %p68 = scmp.eq.s32.totalorder %s67, 0
      %s70 = sadd.s32 %s69, 1
      %s71 = scalar_select %p68, %s69, %s70
      %p74 = pneg %p68
      %p75 = scmp.eq.s32.totalorder %s17, 3
      %p76 = por %p74, %p75
      %p77 = scmp.ne.s32.totalorder %s69, %s72
      %p78 = scmp.eq.s32.totalorder %s17, 0
      %p79 = por %p77, %p78
      %p80 = scmp.ne.s32.totalorder %s69, %s72
      %p81 = scmp.eq.s32.totalorder %s22, 3
      %p82 = por %p80, %p81
      %p83 = scmp.ne.s32.totalorder %s72, %s73
      %p84 = scmp.eq.s32.totalorder %s22, 0
      %p85 = por %p83, %p84
      %p86 = scmp.ne.s32.totalorder %s72, %s73
      %p87 = scmp.eq.s32.totalorder %s23, 3
      %p88 = por %p86, %p87
      %p90 = scmp.ne.s32.totalorder %s73, %s89
      %p91 = scmp.eq.s32.totalorder %s23, 0
      %p92 = por %p90, %p91
      %s94 = sadd.s32 %s93, 1
      %p97 = scmp.eq.s32.totalorder %s17, 3
      %p98 = scmp.ne.s32.totalorder %s93, %s95
      %p99 = scmp.eq.s32.totalorder %s17, 0
      %p100 = por %p98, %p99
      %p101 = scmp.ne.s32.totalorder %s93, %s95
      %p102 = scmp.eq.s32.totalorder %s22, 3
      %p103 = por %p101, %p102
      %p104 = scmp.ne.s32.totalorder %s95, %s96
      %p105 = scmp.eq.s32.totalorder %s22, 0
      %p106 = por %p104, %p105
      %p107 = scmp.ne.s32.totalorder %s95, %s96
      %p108 = scmp.eq.s32.totalorder %s23, 3
      %p109 = por %p107, %p108
      %p111 = scmp.ne.s32.totalorder %s96, %s110
      %p112 = scmp.eq.s32.totalorder %s23, 0
      %p113 = por %p111, %p112
      %s115 = sadd.s32 %s114, 1
      %p118 = scmp.eq.s32.totalorder %s17, 3
      %p119 = scmp.ne.s32.totalorder %s114, %s116
      %p120 = scmp.eq.s32.totalorder %s17, 0
      %p121 = por %p119, %p120
      %p122 = scmp.ne.s32.totalorder %s114, %s116
      %p123 = scmp.eq.s32.totalorder %s22, 3
      %p124 = por %p122, %p123
      %p125 = scmp.ne.s32.totalorder %s116, %s117
      %p126 = scmp.eq.s32.totalorder %s22, 0
      %p127 = por %p125, %p126
      %p128 = scmp.ne.s32.totalorder %s116, %s117
      %p129 = scmp.eq.s32.totalorder %s23, 3
      %p130 = por %p128, %p129
      %p132 = scmp.ne.s32.totalorder %s117, %s131
      %p133 = scmp.eq.s32.totalorder %s23, 0
      %p134 = por %p132, %p133
      %s136 = sadd.s32 %s135, 1
      %p139 = scmp.eq.s32.totalorder %s17, 3
      %p140 = scmp.ne.s32.totalorder %s135, %s137
      %p141 = scmp.eq.s32.totalorder %s17, 0
      %p142 = por %p140, %p141
      %p143 = scmp.ne.s32.totalorder %s135, %s137
      %p144 = scmp.eq.s32.totalorder %s22, 3
      %p145 = por %p143, %p144
      %p146 = scmp.ne.s32.totalorder %s137, %s138
      %p147 = scmp.eq.s32.totalorder %s22, 0
      %p148 = por %p146, %p147
      %p149 = scmp.ne.s32.totalorder %s137, %s138
      %p150 = scmp.eq.s32.totalorder %s23, 3
      %p151 = por %p149, %p150
      %p153 = scmp.ne.s32.totalorder %s138, %s152
      %p154 = scmp.eq.s32.totalorder %s23, 0
      %p155 = por %p153, %p154
      %s157 = sadd.s32 %s156, 1
      %p160 = scmp.eq.s32.totalorder %s17, 3
      %p161 = scmp.ne.s32.totalorder %s156, %s158
      %p162 = scmp.eq.s32.totalorder %s17, 0
      %p163 = por %p161, %p162
      %p164 = scmp.ne.s32.totalorder %s156, %s158
      %p165 = scmp.eq.s32.totalorder %s22, 3
      %p166 = por %p164, %p165
      %p167 = scmp.ne.s32.totalorder %s158, %s159
      %p168 = scmp.eq.s32.totalorder %s22, 0
      %p169 = por %p167, %p168
      %p170 = scmp.ne.s32.totalorder %s158, %s159
      %p171 = scmp.eq.s32.totalorder %s23, 3
      %p172 = por %p170, %p171
      %p174 = scmp.ne.s32.totalorder %s159, %s173
      %p175 = scmp.eq.s32.totalorder %s23, 0
      %p176 = por %p174, %p175
      %s178 = sadd.s32 %s177, 1
      %p181 = scmp.eq.s32.totalorder %s17, 3
      %p182 = scmp.ne.s32.totalorder %s177, %s179
      %p183 = scmp.eq.s32.totalorder %s17, 0
      %p184 = por %p182, %p183
      %p185 = scmp.ne.s32.totalorder %s177, %s179
      %p186 = scmp.eq.s32.totalorder %s22, 3
      %p187 = por %p185, %p186
      %p188 = scmp.ne.s32.totalorder %s179, %s180
      %p189 = scmp.eq.s32.totalorder %s22, 0
      %p190 = por %p188, %p189
      %p191 = scmp.ne.s32.totalorder %s179, %s180
      %p192 = scmp.eq.s32.totalorder %s23, 3
      %p193 = por %p191, %p192
      %p195 = scmp.ne.s32.totalorder %s180, %s194
      %p196 = scmp.eq.s32.totalorder %s23, 0
      %p197 = por %p195, %p196
      %s199 = sadd.s32 %s198, 1
      %p202 = scmp.eq.s32.totalorder %s17, 3
      %p203 = scmp.ne.s32.totalorder %s198, %s200
      %p204 = scmp.eq.s32.totalorder %s17, 0
      %p205 = por %p203, %p204
      %p206 = scmp.ne.s32.totalorder %s198, %s200
      %p207 = scmp.eq.s32.totalorder %s22, 3
      %p208 = por %p206, %p207
      %p209 = scmp.ne.s32.totalorder %s200, %s201
      %p210 = scmp.eq.s32.totalorder %s22, 0
      %p211 = por %p209, %p210
      %p212 = scmp.ne.s32.totalorder %s200, %s201
      %p213 = scmp.eq.s32.totalorder %s23, 3
      %p214 = por %p212, %p213
      %p216 = scmp.ne.s32.totalorder %s201, %s215
      %p217 = scmp.eq.s32.totalorder %s23, 0
      %p218 = por %p216, %p217
      %s219 = ssub.s32 %s24, %s36
      %s220 = ssub.s32 %s25, %s32
      %s221 = sor.u32 %s219, %s220
      %p222 = scmp.eq.s32.totalorder %s221, 0
      %s224 = sadd.s32 %s223, 1
      %s225 = scalar_select %p222, %s223, %s224
      %p228 = pneg %p222
      %p229 = scmp.eq.s32.totalorder %s17, 3
      %p230 = por %p228, %p229
      %p231 = scmp.ne.s32.totalorder %s223, %s226
      %p232 = scmp.eq.s32.totalorder %s17, 0
      %p233 = por %p231, %p232
      %p234 = scmp.ne.s32.totalorder %s223, %s226
      %p235 = scmp.eq.s32.totalorder %s22, 3
      %p236 = por %p234, %p235
      %p237 = scmp.ne.s32.totalorder %s226, %s227
      %p238 = scmp.eq.s32.totalorder %s22, 0
      %p239 = por %p237, %p238
      %p240 = scmp.ne.s32.totalorder %s226, %s227
      %p241 = scmp.eq.s32.totalorder %s23, 3
      %p242 = por %p240, %p241
      %p244 = scmp.ne.s32.totalorder %s227, %s243
      %p245 = scmp.eq.s32.totalorder %s23, 0
      %p246 = por %p244, %p245
      %p247 = scmp.le.s32.totalorder 1, %s17
      %p248 = scmp.lt.s32.totalorder %s17, 5
      %p249 = pnand %p247, %p248
      %p250 = pneg %p249
      // Predicated region
      $region9: #{tpu_custom_call.1} parent=5 // pred_check
        _
      $region10: #{tpu_custom_call.1} parent=5 // pred_check_branch
        %252 = sbr.rel (%p249) target = $region12
      $region11: #{tpu_custom_call.1} parent=5 // pred_region
        %s253 = ssub.s32 %s17, 1
        // Predicated region
        $region13: #{tpu_custom_call.1} parent=11 // pred_check
          %p254 = pneg %p106
        $region14: #{tpu_custom_call.1} parent=11 // pred_check_branch
          %256 = sbr.rel (%p254) target = $region16
        $region15: #{tpu_custom_call.1} parent=11 // pred_region
          _
        $region16: #{tpu_custom_call.1} parent=11 // pred_fallthru
          _
        // Predicated region
        $region17: #{tpu_custom_call.1} parent=11 // pred_check
          %p257 = pneg %p127
        $region18: #{tpu_custom_call.1} parent=11 // pred_check_branch
          %259 = sbr.rel (%p257) target = $region20
        $region19: #{tpu_custom_call.1} parent=11 // pred_region
          _
        $region20: #{tpu_custom_call.1} parent=11 // pred_fallthru
          _
        // Predicated region
        $region21: #{tpu_custom_call.1} parent=11 // pred_check
          %p260 = pneg %p148
        $region22: #{tpu_custom_call.1} parent=11 // pred_check_branch
          %262 = sbr.rel (%p260) target = $region24
        $region23: #{tpu_custom_call.1} parent=11 // pred_region
          _
        $region24: #{tpu_custom_call.1} parent=11 // pred_fallthru
          _
        // Predicated region
        $region25: #{tpu_custom_call.1} parent=11 // pred_check
          %p263 = pneg %p169
        $region26: #{tpu_custom_call.1} parent=11 // pred_check_branch
          %265 = sbr.rel (%p263) target = $region28
        $region27: #{tpu_custom_call.1} parent=11 // pred_region
          _
        $region28: #{tpu_custom_call.1} parent=11 // pred_fallthru
          _
        // Predicated region
        $region29: #{tpu_custom_call.1} parent=11 // pred_check
          %p266 = pneg %p190
        $region30: #{tpu_custom_call.1} parent=11 // pred_check_branch
          %268 = sbr.rel (%p266) target = $region32
        $region31: #{tpu_custom_call.1} parent=11 // pred_region
          _
        $region32: #{tpu_custom_call.1} parent=11 // pred_fallthru
          _
        // Predicated region
        $region33: #{tpu_custom_call.1} parent=11 // pred_check
          %p269 = pneg %p211
        $region34: #{tpu_custom_call.1} parent=11 // pred_check_branch
          %271 = sbr.rel (%p269) target = $region36
        $region35: #{tpu_custom_call.1} parent=11 // pred_region
          _
        $region36: #{tpu_custom_call.1} parent=11 // pred_fallthru
          _
      $region12: #{tpu_custom_call.1} parent=5 // pred_fallthru
        _
      %p272 = scmp.lt.s32.totalorder %s17, 4
      // Predicated region
      $region37: #{tpu_custom_call.1} parent=5 // pred_check
        %p273 = pneg %p272
      $region38: #{tpu_custom_call.1} parent=5 // pred_check_branch
        %275 = sbr.rel (%p273) target = $region40
      $region39: #{tpu_custom_call.1} parent=5 // pred_region
        // Predicated region
        $region41: #{tpu_custom_call.1} parent=39 // pred_check
          %p276 = pneg %p51
        $region42: #{tpu_custom_call.1} parent=39 // pred_check_branch
          %278 = sbr.rel (%p276) target = $region44
        $region43: #{tpu_custom_call.1} parent=39 // pred_region
          %s279 = sand.u32 %s41, 1
          %s280 = sand.u32 %s41, 1
          %s281 = smul.addr %s280, 32
          %s282 = scalar_lea.vmem [#allocation2], %s281
          %s283 = smul.addr %s24, 8
          %s284 = sadd.s32 %s25, %s283
          %s285 = smul.addr %s284, 8
          %s286 = scalar_lea.vmem %s0, %s285
          // Predicated region
          $region45: #{tpu_custom_call.1} parent=43 // pred_check
            _
          $region46: #{tpu_custom_call.1} parent=43 // pred_check_branch
            %288 = sbr.rel (0) target = $region48
          $region47: #{tpu_custom_call.1} parent=43 // pred_region
            // Predicated region
            $region49: #{tpu_custom_call.1} parent=47 // pred_check
              _
            $region50: #{tpu_custom_call.1} parent=47 // pred_check_branch
              %290 = sbr.rel (0) target = $region52
            $region51: #{tpu_custom_call.1} parent=47 // pred_region
              // Predicated region
              $region64: #{tpu_custom_call.1} parent=51 // pred_check
                _
              $region65: #{tpu_custom_call.1} parent=51 // pred_check_branch
                %312 = sbr.rel (0) target = $region67
              $region66: #{tpu_custom_call.1} parent=51 // pred_region
                loop: start=0, step=1, limit=1
                $region68: #{tpu_custom_call.1} parent=66 // loop_pre_header
                  _
                $region69: #{tpu_custom_call.1} parent=66 // loop_header
                  %s314 = sphi 0, %s318
                  %p315 = scmp.ge.s32.totalorder %s314, 1
                  %s319 = sphi %s286, %s286
                  %s320 = sphi %s282, %s282
                $region70: #{tpu_custom_call.1} parent=66 // loop_header_branch
                  %317 = sbr.rel (%p315) target = $region74
                $region71: #{tpu_custom_call.1} parent=66 // loop_body
                  %v321 = vld [vmem:[%s319] sm:$0xff]
                  %322 = vst [vmem:[%s320] sm:$0xff] %v321
                  %v323 = vld [vmem:[%s319 + $0x10] sm:$0xff]
                  %324 = vst [vmem:[%s320 + $0x8] sm:$0xff] %v323
                  %v325 = vld [vmem:[%s319 + $0x20] sm:$0xff]
                  %326 = vst [vmem:[%s320 + $0x10] sm:$0xff] %v325
                  %v327 = vld [vmem:[%s319 + $0x30] sm:$0xff]
                  %328 = vst [vmem:[%s320 + $0x18] sm:$0xff] %v327
                $region72: #{tpu_custom_call.1} parent=66 // loop_footer
                  %s318 = sadd.s32 1, %s314
                $region73: #{tpu_custom_call.1} parent=66 // loop_footer_branch
                  %313 = sbr.rel target = $region69
                $region74: #{tpu_custom_call.1} parent=66 // loop_exit
                  _
              $region67: #{tpu_custom_call.1} parent=51 // pred_fallthru
                _
              // Predicated region
              $region75: #{tpu_custom_call.1} parent=51 // pred_check
                _
              $region76: #{tpu_custom_call.1} parent=51 // pred_check_branch
                %330 = sbr.rel target = $region78
              $region77: #{tpu_custom_call.1} parent=51 // pred_region
                _
              $region78: #{tpu_custom_call.1} parent=51 // pred_fallthru
                _
            $region52: #{tpu_custom_call.1} parent=47 // pred_fallthru
              _
            // Predicated region
            $region53: #{tpu_custom_call.1} parent=47 // pred_check
              _
            $region54: #{tpu_custom_call.1} parent=47 // pred_check_branch
              %292 = sbr.rel target = $region56
            $region55: #{tpu_custom_call.1} parent=47 // pred_region
              %s294 = ssub.s32 256, 1
              loop: start=0, step=1, limit=1
              $region57: #{tpu_custom_call.1} parent=55 // loop_pre_header
                _
              $region58: #{tpu_custom_call.1} parent=55 // loop_header
                %s296 = sphi 0, %s300
                %p297 = scmp.ge.s32.totalorder %s296, 1
                %s301 = sphi %s286, %s286
                %s302 = sphi %s282, %s282
              $region59: #{tpu_custom_call.1} parent=55 // loop_header_branch
                %299 = sbr.rel (%p297) target = $region63
              $region60: #{tpu_custom_call.1} parent=55 // loop_body
                %v303 = vld [vmem:[%s301] sm:%s294]
                %304 = vst [vmem:[%s302] sm:%s294] %v303
                %v305 = vld [vmem:[%s301 + $0x10] sm:%s294]
                %306 = vst [vmem:[%s302 + $0x8] sm:%s294] %v305
                %v307 = vld [vmem:[%s301 + $0x20] sm:%s294]
                %308 = vst [vmem:[%s302 + $0x10] sm:%s294] %v307
                %v309 = vld [vmem:[%s301 + $0x30] sm:%s294]
                %310 = vst [vmem:[%s302 + $0x18] sm:%s294] %v309
              $region61: #{tpu_custom_call.1} parent=55 // loop_footer
                %s300 = sadd.s32 1, %s296
              $region62: #{tpu_custom_call.1} parent=55 // loop_footer_branch
                %295 = sbr.rel target = $region58
              $region63: #{tpu_custom_call.1} parent=55 // loop_exit
                _
            $region56: #{tpu_custom_call.1} parent=47 // pred_fallthru
              _
          $region48: #{tpu_custom_call.1} parent=43 // pred_fallthru
            _
          %331 = vnop
        $region44: #{tpu_custom_call.1} parent=39 // pred_fallthru
          _
        // Predicated region
        $region79: #{tpu_custom_call.1} parent=39 // pred_check
          %p332 = pneg %p79
        $region80: #{tpu_custom_call.1} parent=39 // pred_check_branch
          %334 = sbr.rel (%p332) target = $region82
        $region81: #{tpu_custom_call.1} parent=39 // pred_region
          %s335 = sand.u32 %s69, 1
          %s336 = sand.u32 %s69, 1
          %s337 = smul.addr %s336, 32
          %s338 = scalar_lea.vmem [#allocation3], %s337
          %s339 = smul.addr %s24, 8
          %s340 = sadd.s32 %s25, %s339
          %s341 = smul.addr %s340, 8
          %s342 = scalar_lea.vmem %s1, %s341
          // Predicated region
          $region83: #{tpu_custom_call.1} parent=81 // pred_check
            _
          $region84: #{tpu_custom_call.1} parent=81 // pred_check_branch
            %344 = sbr.rel (0) target = $region86
          $region85: #{tpu_custom_call.1} parent=81 // pred_region
            // Predicated region
            $region87: #{tpu_custom_call.1} parent=85 // pred_check
              _
            $region88: #{tpu_custom_call.1} parent=85 // pred_check_branch
              %346 = sbr.rel (0) target = $region90
            $region89: #{tpu_custom_call.1} parent=85 // pred_region
              // Predicated region
              $region102: #{tpu_custom_call.1} parent=89 // pred_check
                _
              $region103: #{tpu_custom_call.1} parent=89 // pred_check_branch
                %368 = sbr.rel (0) target = $region105
              $region104: #{tpu_custom_call.1} parent=89 // pred_region
                loop: start=0, step=1, limit=1
                $region106: #{tpu_custom_call.1} parent=104 // loop_pre_header
                  _
                $region107: #{tpu_custom_call.1} parent=104 // loop_header
                  %s370 = sphi 0, %s374
                  %p371 = scmp.ge.s32.totalorder %s370, 1
                  %s375 = sphi %s342, %s342
                  %s376 = sphi %s338, %s338
                $region108: #{tpu_custom_call.1} parent=104 // loop_header_branch
                  %373 = sbr.rel (%p371) target = $region112
                $region109: #{tpu_custom_call.1} parent=104 // loop_body
                  %v377 = vld [vmem:[%s375] sm:$0xff]
                  %378 = vst [vmem:[%s376] sm:$0xff] %v377
                  %v379 = vld [vmem:[%s375 + $0x10] sm:$0xff]
                  %380 = vst [vmem:[%s376 + $0x8] sm:$0xff] %v379
                  %v381 = vld [vmem:[%s375 + $0x20] sm:$0xff]
                  %382 = vst [vmem:[%s376 + $0x10] sm:$0xff] %v381
                  %v383 = vld [vmem:[%s375 + $0x30] sm:$0xff]
                  %384 = vst [vmem:[%s376 + $0x18] sm:$0xff] %v383
                $region110: #{tpu_custom_call.1} parent=104 // loop_footer
                  %s374 = sadd.s32 1, %s370
                $region111: #{tpu_custom_call.1} parent=104 // loop_footer_branch
                  %369 = sbr.rel target = $region107
                $region112: #{tpu_custom_call.1} parent=104 // loop_exit
                  _
              $region105: #{tpu_custom_call.1} parent=89 // pred_fallthru
                _
              // Predicated region
              $region113: #{tpu_custom_call.1} parent=89 // pred_check
                _
              $region114: #{tpu_custom_call.1} parent=89 // pred_check_branch
                %386 = sbr.rel target = $region116
              $region115: #{tpu_custom_call.1} parent=89 // pred_region
                _
              $region116: #{tpu_custom_call.1} parent=89 // pred_fallthru
                _
            $region90: #{tpu_custom_call.1} parent=85 // pred_fallthru
              _
            // Predicated region
            $region91: #{tpu_custom_call.1} parent=85 // pred_check
              _
            $region92: #{tpu_custom_call.1} parent=85 // pred_check_branch
              %348 = sbr.rel target = $region94
            $region93: #{tpu_custom_call.1} parent=85 // pred_region
              %s350 = ssub.s32 256, 1
              loop: start=0, step=1, limit=1
              $region95: #{tpu_custom_call.1} parent=93 // loop_pre_header
                _
              $region96: #{tpu_custom_call.1} parent=93 // loop_header
                %s352 = sphi 0, %s356
                %p353 = scmp.ge.s32.totalorder %s352, 1
                %s357 = sphi %s342, %s342
                %s358 = sphi %s338, %s338
              $region97: #{tpu_custom_call.1} parent=93 // loop_header_branch
                %355 = sbr.rel (%p353) target = $region101
              $region98: #{tpu_custom_call.1} parent=93 // loop_body
                %v359 = vld [vmem:[%s357] sm:%s350]
                %360 = vst [vmem:[%s358] sm:%s350] %v359
                %v361 = vld [vmem:[%s357 + $0x10] sm:%s350]
                %362 = vst [vmem:[%s358 + $0x8] sm:%s350] %v361
                %v363 = vld [vmem:[%s357 + $0x20] sm:%s350]
                %364 = vst [vmem:[%s358 + $0x10] sm:%s350] %v363
                %v365 = vld [vmem:[%s357 + $0x30] sm:%s350]
                %366 = vst [vmem:[%s358 + $0x18] sm:%s350] %v365
              $region99: #{tpu_custom_call.1} parent=93 // loop_footer
                %s356 = sadd.s32 1, %s352
              $region100: #{tpu_custom_call.1} parent=93 // loop_footer_branch
                %351 = sbr.rel target = $region96
              $region101: #{tpu_custom_call.1} parent=93 // loop_exit
                _
            $region94: #{tpu_custom_call.1} parent=85 // pred_fallthru
              _
          $region86: #{tpu_custom_call.1} parent=81 // pred_fallthru
            _
          %387 = vnop
        $region82: #{tpu_custom_call.1} parent=39 // pred_fallthru
          _
      $region40: #{tpu_custom_call.1} parent=5 // pred_fallthru
        _
      %p388 = scmp.le.s32.totalorder 1, %s17
      %p389 = scmp.lt.s32.totalorder %s17, 5
      %p390 = pnand %p388, %p389
      %p391 = pneg %p390
      // Predicated region
      $region117: #{tpu_custom_call.1} parent=5 // pred_check
        _
      $region118: #{tpu_custom_call.1} parent=5 // pred_check_branch
        %393 = sbr.rel (%p390) target = $region120
      $region119: #{tpu_custom_call.1} parent=5 // pred_region
        %s394 = ssub.s32 %s17, 1
        %s395 = sand.u32 %s44, 1
        %s396 = sand.u32 %s44, 1
        %s397 = smul.addr %s396, 32
        %s398 = scalar_lea.vmem [#allocation2], %s397
        // Predicated region
        $region121: #{tpu_custom_call.1} parent=119 // pred_check
          %p399 = pneg %p57
        $region122: #{tpu_custom_call.1} parent=119 // pred_check_branch
          %401 = sbr.rel (%p399) target = $region124
        $region123: #{tpu_custom_call.1} parent=119 // pred_region
          _
        $region124: #{tpu_custom_call.1} parent=119 // pred_fallthru
          _
        %s402 = sand.u32 %s72, 1
        %s403 = sand.u32 %s72, 1
        %s404 = smul.addr %s403, 32
        %s405 = scalar_lea.vmem [#allocation3], %s404
        // Predicated region
        $region125: #{tpu_custom_call.1} parent=119 // pred_check
          %p406 = pneg %p85
        $region126: #{tpu_custom_call.1} parent=119 // pred_check_branch
          %408 = sbr.rel (%p406) target = $region128
        $region127: #{tpu_custom_call.1} parent=119 // pred_region
          _
        $region128: #{tpu_custom_call.1} parent=119 // pred_fallthru
          _
        %s409 = sand.u32 %s44, 1
        %s410 = sand.u32 %s44, 1
        %s411 = smul.addr %s410, 32
        %s412 = scalar_lea.vmem [#allocation2], %s411
        %p413 = pneg %p57
        %p414 = pneg %p54
        %s415 = sand.u32 %s72, 1
        %s416 = sand.u32 %s72, 1
        %s417 = smul.addr %s416, 32
        %s418 = scalar_lea.vmem [#allocation3], %s417
        %p419 = pneg %p85
        %p420 = pneg %p82
        %p421 = pneg %p106
        %p422 = pneg %p103
        %p423 = pneg %p127
        %p424 = pneg %p124
        %p425 = pneg %p148
        %p426 = pneg %p145
        %p427 = pneg %p169
        %p428 = pneg %p166
        %p429 = pneg %p190
        %p430 = pneg %p187
        %p431 = pneg %p211
        %p432 = pneg %p208
        %p433 = pneg %p239
        %p434 = pneg %p236
        %s435 = sand.u32 %s226, 1
        %s436 = scalar_lea.sflag [#allocation5], %s435
        %s437 = sand.u32 %s226, 1
        %s438 = smul.addr %s437, 64
        %s439 = scalar_lea.vmem [#allocation4], %s438
        %v441 = vld [vmem:[%s2] sm:$0xf]
        %v442 = vld [vmem:[%s2 + $0x4] sm:$0xf]
        %v443 = vld [vmem:[%s2 + $0x8] sm:$0xf]
        %v444 = vld [vmem:[%s2 + $0xc] sm:$0xf]
        %v445 = vld [vmem:[%s2 + $0x10] sm:$0xf]
        %v446 = vld [vmem:[%s2 + $0x14] sm:$0xf]
        %v447 = vld [vmem:[%s2 + $0x18] sm:$0xf]
        %v448 = vld [vmem:[%s2 + $0x1c] sm:$0xf]
        %v449 = vld [vmem:[%s2 + $0x20] sm:$0xf]
        %v450 = vld [vmem:[%s2 + $0x24] sm:$0xf]
        %v451 = vld [vmem:[%s2 + $0x28] sm:$0xf]
        %v452 = vld [vmem:[%s2 + $0x2c] sm:$0xf]
        %v453 = vld [vmem:[%s2 + $0x30] sm:$0xf]
        %v454 = vld [vmem:[%s2 + $0x34] sm:$0xf]
        %v455 = vld [vmem:[%s2 + $0x38] sm:$0xf]
        %v456 = vld [vmem:[%s2 + $0x3c] sm:$0xf]
        %v457 = vld [vmem:[%s3] sm:$0xf]
        %v458 = vld [vmem:[%s3 + $0x4] sm:$0xf]
        %v459 = vld [vmem:[%s3 + $0x8] sm:$0xf]
        %v460 = vld [vmem:[%s3 + $0xc] sm:$0xf]
        %v461 = vld [vmem:[%s3 + $0x10] sm:$0xf]
        %v462 = vld [vmem:[%s3 + $0x14] sm:$0xf]
        %v463 = vld [vmem:[%s3 + $0x18] sm:$0xf]
        %v464 = vld [vmem:[%s3 + $0x1c] sm:$0xf]
        %v465 = vld [vmem:[%s3 + $0x20] sm:$0xf]
        %v466 = vld [vmem:[%s3 + $0x24] sm:$0xf]
        %v467 = vld [vmem:[%s3 + $0x28] sm:$0xf]
        %v468 = vld [vmem:[%s3 + $0x2c] sm:$0xf]
        %v469 = vld [vmem:[%s3 + $0x30] sm:$0xf]
        %v470 = vld [vmem:[%s3 + $0x34] sm:$0xf]
        %v471 = vld [vmem:[%s3 + $0x38] sm:$0xf]
        %v472 = vld [vmem:[%s3 + $0x3c] sm:$0xf]
        %v473 = vld [vmem:[%s4] sm:$0xf]
        %v474 = vld [vmem:[%s4 + $0x4] sm:$0xf]
        %v475 = vld [vmem:[%s4 + $0x8] sm:$0xf]
        %v476 = vld [vmem:[%s4 + $0xc] sm:$0xf]
        %v477 = vld [vmem:[%s4 + $0x10] sm:$0xf]
        %v478 = vld [vmem:[%s4 + $0x14] sm:$0xf]
        %v479 = vld [vmem:[%s4 + $0x18] sm:$0xf]
        %v480 = vld [vmem:[%s4 + $0x1c] sm:$0xf]
        %v481 = vld [vmem:[%s5] sm:$0xff]
        %v482 = vld [vmem:[%s5 + $0x8] sm:$0xff]
        %v483 = vld [vmem:[%s5 + $0x10] sm:$0xff]
        %v484 = vld [vmem:[%s5 + $0x18] sm:$0xff]
        %v485 = vld [vmem:[%s5 + $0x20] sm:$0xff]
        %v486 = vld [vmem:[%s5 + $0x28] sm:$0xff]
        %v487 = vld [vmem:[%s5 + $0x30] sm:$0xff]
        %v488 = vld [vmem:[%s5 + $0x38] sm:$0xff]
        %v489 = vld [vmem:[%s5 + $0x40] sm:$0xff]
        %v490 = vld [vmem:[%s5 + $0x48] sm:$0xff]
        %v491 = vld [vmem:[%s5 + $0x50] sm:$0xff]
        %v492 = vld [vmem:[%s5 + $0x58] sm:$0xff]
        %v493 = vld [vmem:[%s5 + $0x60] sm:$0xff]
        %v494 = vld [vmem:[%s5 + $0x68] sm:$0xff]
        %v495 = vld [vmem:[%s5 + $0x70] sm:$0xff]
        %v496 = vld [vmem:[%s5 + $0x78] sm:$0xff]
        %v497 = vld [vmem:[%s6] sm:$0xff]
        %v498 = vld [vmem:[%s6 + $0x8] sm:$0xff]
        %v499 = vld [vmem:[%s6 + $0x10] sm:$0xff]
        %v500 = vld [vmem:[%s6 + $0x18] sm:$0xff]
        %v501 = vld [vmem:[%s6 + $0x20] sm:$0xff]
        %v502 = vld [vmem:[%s6 + $0x28] sm:$0xff]
        %v503 = vld [vmem:[%s6 + $0x30] sm:$0xff]
        %v504 = vld [vmem:[%s6 + $0x38] sm:$0xff]
        %v505 = vld [vmem:[%s6 + $0x40] sm:$0xff]
        %v506 = vld [vmem:[%s6 + $0x48] sm:$0xff]
        %v507 = vld [vmem:[%s6 + $0x50] sm:$0xff]
        %v508 = vld [vmem:[%s6 + $0x58] sm:$0xff]
        %v509 = vld [vmem:[%s6 + $0x60] sm:$0xff]
        %v510 = vld [vmem:[%s6 + $0x68] sm:$0xff]
        %v511 = vld [vmem:[%s6 + $0x70] sm:$0xff]
        %v512 = vld [vmem:[%s6 + $0x78] sm:$0xff]
        %v513 = vld [vmem:[%s7] sm:$0xff]
        %v514 = vld [vmem:[%s7 + $0x8] sm:$0xff]
        %v515 = vld [vmem:[%s7 + $0x10] sm:$0xff]
        %v516 = vld [vmem:[%s7 + $0x18] sm:$0xff]
        %v517 = vld [vmem:[%s7 + $0x20] sm:$0xff]
        %v518 = vld [vmem:[%s7 + $0x28] sm:$0xff]
        %v519 = vld [vmem:[%s7 + $0x30] sm:$0xff]
        %v520 = vld [vmem:[%s7 + $0x38] sm:$0xff]
        %v521 = vld [vmem:[%s398] sm:$0xff]
        %v522 = vld [vmem:[%s398 + $0x8] sm:$0xff]
        %v523 = vld [vmem:[%s398 + $0x10] sm:$0xff]
        %v524 = vld [vmem:[%s398 + $0x18] sm:$0xff]
        %v525 = vld [vmem:[%s405] sm:$0xff]
        %v526 = vld [vmem:[%s405 + $0x8] sm:$0xff]
        %v527 = vld [vmem:[%s405 + $0x10] sm:$0xff]
        %v528 = vld [vmem:[%s405 + $0x18] sm:$0xff]
        %v529 = vpack.c.bf16 %v522, %v521
        %v530 = vpack.c.bf16 %v524, %v523
        %v531 = vpack.c.bf16 %v526, %v525
        %v532 = vpack.c.bf16 %v528, %v527
        %534 = vset.pattern.permute.xlu0 0
        %535 = vperm.xlu0 %534, %v481
        %v536 = vpop.permute.xlu0 %535
        %539 = vset.pattern.permute.xlu0 0
        %540 = vperm.xlu0 %539, %v482
        %v541 = vpop.permute.xlu0 %540
        %544 = vset.pattern.permute.xlu0 0
        %545 = vperm.xlu0 %544, %v483
        %v546 = vpop.permute.xlu0 %545
        %549 = vset.pattern.permute.xlu0 0
        %550 = vperm.xlu0 %549, %v484
        %v551 = vpop.permute.xlu0 %550
        %554 = vset.pattern.permute.xlu0 0
        %555 = vperm.xlu0 %554, %v485
        %v556 = vpop.permute.xlu0 %555
        %559 = vset.pattern.permute.xlu0 0
        %560 = vperm.xlu0 %559, %v486
        %v561 = vpop.permute.xlu0 %560
        %564 = vset.pattern.permute.xlu0 0
        %565 = vperm.xlu0 %564, %v487
        %v566 = vpop.permute.xlu0 %565
        %569 = vset.pattern.permute.xlu0 0
        %570 = vperm.xlu0 %569, %v488
        %v571 = vpop.permute.xlu0 %570
        %574 = vset.pattern.permute.xlu0 0
        %575 = vperm.xlu0 %574, %v489
        %v576 = vpop.permute.xlu0 %575
        %579 = vset.pattern.permute.xlu0 0
        %580 = vperm.xlu0 %579, %v490
        %v581 = vpop.permute.xlu0 %580
        %584 = vset.pattern.permute.xlu0 0
        %585 = vperm.xlu0 %584, %v491
        %v586 = vpop.permute.xlu0 %585
        %589 = vset.pattern.permute.xlu0 0
        %590 = vperm.xlu0 %589, %v492
        %v591 = vpop.permute.xlu0 %590
        %594 = vset.pattern.permute.xlu0 0
        %595 = vperm.xlu0 %594, %v493
        %v596 = vpop.permute.xlu0 %595
        %599 = vset.pattern.permute.xlu0 0
        %600 = vperm.xlu0 %599, %v494
        %v601 = vpop.permute.xlu0 %600
        %604 = vset.pattern.permute.xlu0 0
        %605 = vperm.xlu0 %604, %v495
        %v606 = vpop.permute.xlu0 %605
        %609 = vset.pattern.permute.xlu0 0
        %610 = vperm.xlu0 %609, %v496
        %v611 = vpop.permute.xlu0 %610
        %v629 = vunpack.c.l.b16 %v441
        %v630 = vunpack.c.l.b16 %v442
        %v631 = vunpack.c.l.b16 %v443
        %v632 = vunpack.c.l.b16 %v444
        %v633 = vunpack.c.l.b16 %v445
        %v634 = vunpack.c.l.b16 %v446
        %v635 = vunpack.c.l.b16 %v447
        %v636 = vunpack.c.l.b16 %v448
        %v637 = vunpack.c.l.b16 %v449
        %v638 = vunpack.c.l.b16 %v450
        %v639 = vunpack.c.l.b16 %v451
        %v640 = vunpack.c.l.b16 %v452
        %v641 = vunpack.c.l.b16 %v453
        %v642 = vunpack.c.l.b16 %v454
        %v643 = vunpack.c.l.b16 %v455
        %v644 = vunpack.c.l.b16 %v456
        %v645 = vpack.c.b16 %v630, %v629
        %v646 = vpack.c.b16 %v632, %v631
        %v647 = vpack.c.b16 %v634, %v633
        %v648 = vpack.c.b16 %v636, %v635
        %v649 = vpack.c.b16 %v638, %v637
        %v650 = vpack.c.b16 %v640, %v639
        %v651 = vpack.c.b16 %v642, %v641
        %v652 = vpack.c.b16 %v644, %v643
        %vm653 = vcmask 523264
        %v655 = vsel %vm653, %v645, 0
        %v658 = vsel %vm653, %v646, 0
        %v661 = vsel %vm653, %v647, 0
        %v664 = vsel %vm653, %v648, 0
        %v667 = vsel %vm653, %v649, 0
        %v670 = vsel %vm653, %v650, 0
        %v673 = vsel %vm653, %v651, 0
        %v676 = vsel %vm653, %v652, 0
        %678 = vmatprep.subr.bf16.mxu0 0
        %679 = vmatpush1.bf16.msra.mxu0 0
        %680 = vmatprep.subr.bf16.mxu0 0
        %681 = vmatpush1.bf16.msra.mxu0 0
        %682 = vmatprep.subr.bf16.mxu0 0
        %683 = vmatpush1.bf16.msra.mxu0 0
        %684 = vmatprep.subr.bf16.mxu0 0
        %685 = vmatpush1.bf16.msra.mxu0 0
        %686 = vmatprep.subr.bf16.mxu0 0
        %687 = vmatpush1.bf16.msra.mxu0 %v532
        %688 = vmatprep.subr.bf16.mxu0 0
        %689 = vmatpush1.bf16.msra.mxu0 %v531
        %690 = vmatprep.subr.bf16.mxu0 0
        %691 = vmatpush1.bf16.msra.mxu0 %v530
        %692 = vmatprep.subr.bf16.mxu0 0
        %693 = vmatpush1.bf16.msra.mxu0 %v529
        %694 = vmatprep.subr.bf16.mxu0 0
        %695 = vmatpush2.bf16.msra.mxu0 0
        %696 = vmatprep.subr.bf16.mxu0 0
        %697 = vmatpush2.bf16.msra.mxu0 0
        %698 = vmatprep.subr.bf16.mxu0 0
        %699 = vmatpush2.bf16.msra.mxu0 0
        %700 = vmatprep.subr.bf16.mxu0 0
        %701 = vmatpush2.bf16.msra.mxu0 0
        %702 = vmatprep.subr.bf16.mxu0 0
        %703 = vmatpush2.bf16.msra.mxu0 0
        %704 = vmatprep.subr.bf16.mxu0 0
        %705 = vmatpush2.bf16.msra.mxu0 0
        %706 = vmatprep.subr.bf16.mxu0 0
        %707 = vmatpush2.bf16.msra.mxu0 0
        %708 = vmatprep.subr.bf16.mxu0 0
        %709 = vmatpush2.bf16.msra.mxu0 0
        %710 = vmatprep.mubr.bf16.mxu0 0
        %711 = vmatmul.mubr.bf16.gmra.mxu0 %v655
        %v712 = vpop.f32.mrf.mxu0
        %v713 = vadd.f32 %v536, %v712
        %v714 = vpop.f32.mrf.mxu0
        %v715 = vpop.f32.mrf.mxu0
        %v716 = vadd.f32 %v541, %v715
        %v717 = vpop.f32.mrf.mxu0
        %718 = vmatprep.mubr.bf16.mxu0 0
        %719 = vmatmul.mubr.bf16.gmra.mxu0 %v658
        %v720 = vpop.f32.mrf.mxu0
        %v721 = vadd.f32 %v546, %v720
        %v722 = vpop.f32.mrf.mxu0
        %v723 = vpop.f32.mrf.mxu0
        %v724 = vadd.f32 %v551, %v723
        %v725 = vpop.f32.mrf.mxu0
        %726 = vmatprep.mubr.bf16.mxu0 0
        %727 = vmatmul.mubr.bf16.gmra.mxu0 %v661
        %v728 = vpop.f32.mrf.mxu0
        %v729 = vadd.f32 %v556, %v728
        %v730 = vpop.f32.mrf.mxu0
        %v731 = vpop.f32.mrf.mxu0
        %v732 = vadd.f32 %v561, %v731
        %v733 = vpop.f32.mrf.mxu0
        %734 = vmatprep.mubr.bf16.mxu0 0
        %735 = vmatmul.mubr.bf16.gmra.mxu0 %v664
        %v736 = vpop.f32.mrf.mxu0
        %v737 = vadd.f32 %v566, %v736
        %v738 = vpop.f32.mrf.mxu0
        %v739 = vpop.f32.mrf.mxu0
        %v740 = vadd.f32 %v571, %v739
        %v741 = vpop.f32.mrf.mxu0
        %742 = vmatprep.mubr.bf16.mxu0 0
        %743 = vmatmul.mubr.bf16.gmra.mxu0 %v667
        %v744 = vpop.f32.mrf.mxu0
        %v745 = vadd.f32 %v576, %v744
        %v746 = vpop.f32.mrf.mxu0
        %v747 = vpop.f32.mrf.mxu0
        %v748 = vadd.f32 %v581, %v747
        %v749 = vpop.f32.mrf.mxu0
        %750 = vmatprep.mubr.bf16.mxu0 0
        %751 = vmatmul.mubr.bf16.gmra.mxu0 %v670
        %v752 = vpop.f32.mrf.mxu0
        %v753 = vadd.f32 %v586, %v752
        %v754 = vpop.f32.mrf.mxu0
        %v755 = vpop.f32.mrf.mxu0
        %v756 = vadd.f32 %v591, %v755
        %v757 = vpop.f32.mrf.mxu0
        %758 = vmatprep.mubr.bf16.mxu0 0
        %759 = vmatmul.mubr.bf16.gmra.mxu0 %v673
        %v760 = vpop.f32.mrf.mxu0
        %v761 = vadd.f32 %v596, %v760
        %v762 = vpop.f32.mrf.mxu0
        %v763 = vpop.f32.mrf.mxu0
        %v764 = vadd.f32 %v601, %v763
        %v765 = vpop.f32.mrf.mxu0
        %766 = vmatprep.mubr.bf16.mxu0 0
        %767 = vmatmul.mubr.bf16.gmra.mxu0 %v676
        %v768 = vpop.f32.mrf.mxu0
        %v769 = vadd.f32 %v606, %v768
        %v770 = vpop.f32.mrf.mxu0
        %v771 = vpop.f32.mrf.mxu0
        %v772 = vadd.f32 %v611, %v771
        %v773 = vpop.f32.mrf.mxu0
        %774 = vdwg.mxu0
        %v775 = vmul.f32 %v713, 0.01
        %v776 = vmul.f32 %v716, 0.01
        %v777 = vmul.f32 %v721, 0.01
        %v778 = vmul.f32 %v724, 0.01
        %v779 = vmul.f32 %v729, 0.01
        %v780 = vmul.f32 %v732, 0.01
        %v781 = vmul.f32 %v737, 0.01
        %v782 = vmul.f32 %v740, 0.01
        %v783 = vmul.f32 %v745, 0.01
        %v784 = vmul.f32 %v748, 0.01
        %v785 = vmul.f32 %v753, 0.01
        %v786 = vmul.f32 %v756, 0.01
        %v787 = vmul.f32 %v761, 0.01
        %v788 = vmul.f32 %v764, 0.01
        %v789 = vmul.f32 %v769, 0.01
        %v790 = vmul.f32 %v772, 0.01
        %v791 = vmax.f32 %v713, %v775
        %v792 = vmax.f32 %v716, %v776
        %v793 = vmax.f32 %v721, %v777
        %v794 = vmax.f32 %v724, %v778
        %v795 = vmax.f32 %v729, %v779
        %v796 = vmax.f32 %v732, %v780
        %v797 = vmax.f32 %v737, %v781
        %v798 = vmax.f32 %v740, %v782
        %v799 = vmax.f32 %v745, %v783
        %v800 = vmax.f32 %v748, %v784
        %v801 = vmax.f32 %v753, %v785
        %v802 = vmax.f32 %v756, %v786
        %v803 = vmax.f32 %v761, %v787
        %v804 = vmax.f32 %v764, %v788
        %v805 = vmax.f32 %v769, %v789
        %v806 = vmax.f32 %v772, %v790
        %v807 = vadd.f32 %v791, %v799
        %v808 = vadd.f32 %v792, %v800
        %v809 = vadd.f32 %v793, %v801
        %v810 = vadd.f32 %v794, %v802
        %v811 = vadd.f32 %v795, %v803
        %v812 = vadd.f32 %v796, %v804
        %v813 = vadd.f32 %v797, %v805
        %v814 = vadd.f32 %v798, %v806
        %v815 = vpack.c.bf16 %v808, %v807
        %v816 = vpack.c.bf16 %v810, %v809
        %v817 = vpack.c.bf16 %v812, %v811
        %v818 = vpack.c.bf16 %v814, %v813
        %v819 = vpack.c.bf16 %v800, %v799
        %v820 = vpack.c.bf16 %v802, %v801
        %v821 = vpack.c.bf16 %v804, %v803
        %v822 = vpack.c.bf16 %v806, %v805
        %824 = vset.pattern.permute.xlu0 0
        %825 = vperm.xlu0 %824, %v497
        %v826 = vpop.permute.xlu0 %825
        %829 = vset.pattern.permute.xlu0 0
        %830 = vperm.xlu0 %829, %v498
        %v831 = vpop.permute.xlu0 %830
        %834 = vset.pattern.permute.xlu0 0
        %835 = vperm.xlu0 %834, %v499
        %v836 = vpop.permute.xlu0 %835
        %839 = vset.pattern.permute.xlu0 0
        %840 = vperm.xlu0 %839, %v500
        %v841 = vpop.permute.xlu0 %840
        %844 = vset.pattern.permute.xlu0 0
        %845 = vperm.xlu0 %844, %v501
        %v846 = vpop.permute.xlu0 %845
        %849 = vset.pattern.permute.xlu0 0
        %850 = vperm.xlu0 %849, %v502
        %v851 = vpop.permute.xlu0 %850
        %854 = vset.pattern.permute.xlu0 0
        %855 = vperm.xlu0 %854, %v503
        %v856 = vpop.permute.xlu0 %855
        %859 = vset.pattern.permute.xlu0 0
        %860 = vperm.xlu0 %859, %v504
        %v861 = vpop.permute.xlu0 %860
        %864 = vset.pattern.permute.xlu0 0
        %865 = vperm.xlu0 %864, %v505
        %v866 = vpop.permute.xlu0 %865
        %869 = vset.pattern.permute.xlu0 0
        %870 = vperm.xlu0 %869, %v506
        %v871 = vpop.permute.xlu0 %870
        %874 = vset.pattern.permute.xlu0 0
        %875 = vperm.xlu0 %874, %v507
        %v876 = vpop.permute.xlu0 %875
        %879 = vset.pattern.permute.xlu0 0
        %880 = vperm.xlu0 %879, %v508
        %v881 = vpop.permute.xlu0 %880
        %884 = vset.pattern.permute.xlu0 0
        %885 = vperm.xlu0 %884, %v509
        %v886 = vpop.permute.xlu0 %885
        %889 = vset.pattern.permute.xlu0 0
        %890 = vperm.xlu0 %889, %v510
        %v891 = vpop.permute.xlu0 %890
        %894 = vset.pattern.permute.xlu0 0
        %895 = vperm.xlu0 %894, %v511
        %v896 = vpop.permute.xlu0 %895
        %899 = vset.pattern.permute.xlu0 0
        %900 = vperm.xlu0 %899, %v512
        %v901 = vpop.permute.xlu0 %900
        %v919 = vunpack.c.l.b16 %v457
        %v920 = vunpack.c.l.b16 %v458
        %v921 = vunpack.c.l.b16 %v459
        %v922 = vunpack.c.l.b16 %v460
        %v923 = vunpack.c.l.b16 %v461
        %v924 = vunpack.c.l.b16 %v462
        %v925 = vunpack.c.l.b16 %v463
        %v926 = vunpack.c.l.b16 %v464
        %v927 = vunpack.c.l.b16 %v465
        %v928 = vunpack.c.l.b16 %v466
        %v929 = vunpack.c.l.b16 %v467
        %v930 = vunpack.c.l.b16 %v468
        %v931 = vunpack.c.l.b16 %v469
        %v932 = vunpack.c.l.b16 %v470
        %v933 = vunpack.c.l.b16 %v471
        %v934 = vunpack.c.l.b16 %v472
        %v935 = vpack.c.b16 %v920, %v919
        %v936 = vpack.c.b16 %v922, %v921
        %v937 = vpack.c.b16 %v924, %v923
        %v938 = vpack.c.b16 %v926, %v925
        %v939 = vpack.c.b16 %v928, %v927
        %v940 = vpack.c.b16 %v930, %v929
        %v941 = vpack.c.b16 %v932, %v931
        %v942 = vpack.c.b16 %v934, %v933
        %951 = vmatprep.subr.bf16.mxu0 0
        %952 = vmatpush1.bf16.msra.mxu0 %v822
        %953 = vmatprep.subr.bf16.mxu0 0
        %954 = vmatpush1.bf16.msra.mxu0 %v821
        %955 = vmatprep.subr.bf16.mxu0 0
        %956 = vmatpush1.bf16.msra.mxu0 %v820
        %957 = vmatprep.subr.bf16.mxu0 0
        %958 = vmatpush1.bf16.msra.mxu0 %v819
        %959 = vmatprep.subr.bf16.mxu0 0
        %960 = vmatpush1.bf16.msra.mxu0 %v818
        %961 = vmatprep.subr.bf16.mxu0 0
        %962 = vmatpush1.bf16.msra.mxu0 %v817
        %963 = vmatprep.subr.bf16.mxu0 0
        %964 = vmatpush1.bf16.msra.mxu0 %v816
        %965 = vmatprep.subr.bf16.mxu0 0
        %966 = vmatpush1.bf16.msra.mxu0 %v815
        %967 = vmatprep.subr.bf16.mxu0 0
        %968 = vmatpush2.bf16.msra.mxu0 0
        %969 = vmatprep.subr.bf16.mxu0 0
        %970 = vmatpush2.bf16.msra.mxu0 0
        %971 = vmatprep.subr.bf16.mxu0 0
        %972 = vmatpush2.bf16.msra.mxu0 0
        %973 = vmatprep.subr.bf16.mxu0 0
        %974 = vmatpush2.bf16.msra.mxu0 0
        %975 = vmatprep.subr.bf16.mxu0 0
        %976 = vmatpush2.bf16.msra.mxu0 0
        %977 = vmatprep.subr.bf16.mxu0 0
        %978 = vmatpush2.bf16.msra.mxu0 0
        %979 = vmatprep.subr.bf16.mxu0 0
        %980 = vmatpush2.bf16.msra.mxu0 0
        %981 = vmatprep.subr.bf16.mxu0 0
        %982 = vmatpush2.bf16.msra.mxu0 0
        %983 = vmatprep.mubr.bf16.mxu0 0
        %984 = vmatmul.mubr.bf16.gmra.mxu0 %v935
        %v985 = vpop.f32.mrf.mxu0
        %v986 = vadd.f32 %v826, %v985
        %v987 = vpop.f32.mrf.mxu0
        %v988 = vpop.f32.mrf.mxu0
        %v989 = vadd.f32 %v831, %v988
        %v990 = vpop.f32.mrf.mxu0
        %991 = vmatprep.mubr.bf16.mxu0 0
        %992 = vmatmul.mubr.bf16.gmra.mxu0 %v936
        %v993 = vpop.f32.mrf.mxu0
        %v994 = vadd.f32 %v836, %v993
        %v995 = vpop.f32.mrf.mxu0
        %v996 = vpop.f32.mrf.mxu0
        %v997 = vadd.f32 %v841, %v996
        %v998 = vpop.f32.mrf.mxu0
        %999 = vmatprep.mubr.bf16.mxu0 0
        %1000 = vmatmul.mubr.bf16.gmra.mxu0 %v937
        %v1001 = vpop.f32.mrf.mxu0
        %v1002 = vadd.f32 %v846, %v1001
        %v1003 = vpop.f32.mrf.mxu0
        %v1004 = vpop.f32.mrf.mxu0
        %v1005 = vadd.f32 %v851, %v1004
        %v1006 = vpop.f32.mrf.mxu0
        %1007 = vmatprep.mubr.bf16.mxu0 0
        %1008 = vmatmul.mubr.bf16.gmra.mxu0 %v938
        %v1009 = vpop.f32.mrf.mxu0
        %v1010 = vadd.f32 %v856, %v1009
        %v1011 = vpop.f32.mrf.mxu0
        %v1012 = vpop.f32.mrf.mxu0
        %v1013 = vadd.f32 %v861, %v1012
        %v1014 = vpop.f32.mrf.mxu0
        %1015 = vmatprep.mubr.bf16.mxu0 0
        %1016 = vmatmul.mubr.bf16.gmra.mxu0 %v939
        %v1017 = vpop.f32.mrf.mxu0
        %v1018 = vadd.f32 %v866, %v1017
        %v1019 = vpop.f32.mrf.mxu0
        %v1020 = vpop.f32.mrf.mxu0
        %v1021 = vadd.f32 %v871, %v1020
        %v1022 = vpop.f32.mrf.mxu0
        %1023 = vmatprep.mubr.bf16.mxu0 0
        %1024 = vmatmul.mubr.bf16.gmra.mxu0 %v940
        %v1025 = vpop.f32.mrf.mxu0
        %v1026 = vadd.f32 %v876, %v1025
        %v1027 = vpop.f32.mrf.mxu0
        %v1028 = vpop.f32.mrf.mxu0
        %v1029 = vadd.f32 %v881, %v1028
        %v1030 = vpop.f32.mrf.mxu0
        %1031 = vmatprep.mubr.bf16.mxu0 0
        %1032 = vmatmul.mubr.bf16.gmra.mxu0 %v941
        %v1033 = vpop.f32.mrf.mxu0
        %v1034 = vadd.f32 %v886, %v1033
        %v1035 = vpop.f32.mrf.mxu0
        %v1036 = vpop.f32.mrf.mxu0
        %v1037 = vadd.f32 %v891, %v1036
        %v1038 = vpop.f32.mrf.mxu0
        %1039 = vmatprep.mubr.bf16.mxu0 0
        %1040 = vmatmul.mubr.bf16.gmra.mxu0 %v942
        %v1041 = vpop.f32.mrf.mxu0
        %v1042 = vadd.f32 %v896, %v1041
        %v1043 = vpop.f32.mrf.mxu0
        %v1044 = vpop.f32.mrf.mxu0
        %v1045 = vadd.f32 %v901, %v1044
        %v1046 = vpop.f32.mrf.mxu0
        %1047 = vdwg.mxu0
        %v1048 = vmul.f32 %v986, 0.01
        %v1049 = vmul.f32 %v989, 0.01
        %v1050 = vmul.f32 %v994, 0.01
        %v1051 = vmul.f32 %v997, 0.01
        %v1052 = vmul.f32 %v1002, 0.01
        %v1053 = vmul.f32 %v1005, 0.01
        %v1054 = vmul.f32 %v1010, 0.01
        %v1055 = vmul.f32 %v1013, 0.01
        %v1056 = vmul.f32 %v1018, 0.01
        %v1057 = vmul.f32 %v1021, 0.01
        %v1058 = vmul.f32 %v1026, 0.01
        %v1059 = vmul.f32 %v1029, 0.01
        %v1060 = vmul.f32 %v1034, 0.01
        %v1061 = vmul.f32 %v1037, 0.01
        %v1062 = vmul.f32 %v1042, 0.01
        %v1063 = vmul.f32 %v1045, 0.01
        %v1064 = vmax.f32 %v986, %v1048
        %v1065 = vmax.f32 %v989, %v1049
        %v1066 = vmax.f32 %v994, %v1050
        %v1067 = vmax.f32 %v997, %v1051
        %v1068 = vmax.f32 %v1002, %v1052
        %v1069 = vmax.f32 %v1005, %v1053
        %v1070 = vmax.f32 %v1010, %v1054
        %v1071 = vmax.f32 %v1013, %v1055
        %v1072 = vmax.f32 %v1018, %v1056
        %v1073 = vmax.f32 %v1021, %v1057
        %v1074 = vmax.f32 %v1026, %v1058
        %v1075 = vmax.f32 %v1029, %v1059
        %v1076 = vmax.f32 %v1034, %v1060
        %v1077 = vmax.f32 %v1037, %v1061
        %v1078 = vmax.f32 %v1042, %v1062
        %v1079 = vmax.f32 %v1045, %v1063
        %v1080 = vadd.f32 %v1064, %v1072
        %v1081 = vadd.f32 %v1065, %v1073
        %v1082 = vadd.f32 %v1066, %v1074
        %v1083 = vadd.f32 %v1067, %v1075
        %v1084 = vadd.f32 %v1068, %v1076
        %v1085 = vadd.f32 %v1069, %v1077
        %v1086 = vadd.f32 %v1070, %v1078
        %v1087 = vadd.f32 %v1071, %v1079
        %v1088 = vpack.c.bf16 %v1081, %v1080
        %v1089 = vpack.c.bf16 %v1083, %v1082
        %v1090 = vpack.c.bf16 %v1085, %v1084
        %v1091 = vpack.c.bf16 %v1087, %v1086
        %1093 = vset.pattern.permute.xlu0 0
        %1094 = vperm.xlu0 %1093, %v513
        %v1095 = vpop.permute.xlu0 %1094
        %1098 = vset.pattern.permute.xlu0 0
        %1099 = vperm.xlu0 %1098, %v514
        %v1100 = vpop.permute.xlu0 %1099
        %1103 = vset.pattern.permute.xlu0 0
        %1104 = vperm.xlu0 %1103, %v515
        %v1105 = vpop.permute.xlu0 %1104
        %1108 = vset.pattern.permute.xlu0 0
        %1109 = vperm.xlu0 %1108, %v516
        %v1110 = vpop.permute.xlu0 %1109
        %1113 = vset.pattern.permute.xlu0 0
        %1114 = vperm.xlu0 %1113, %v517
        %v1115 = vpop.permute.xlu0 %1114
        %1118 = vset.pattern.permute.xlu0 0
        %1119 = vperm.xlu0 %1118, %v518
        %v1120 = vpop.permute.xlu0 %1119
        %1123 = vset.pattern.permute.xlu0 0
        %1124 = vperm.xlu0 %1123, %v519
        %v1125 = vpop.permute.xlu0 %1124
        %1128 = vset.pattern.permute.xlu0 0
        %1129 = vperm.xlu0 %1128, %v520
        %v1130 = vpop.permute.xlu0 %1129
        %v1140 = vunpack.c.l.b16 %v473
        %v1141 = vunpack.c.l.b16 %v474
        %v1142 = vunpack.c.l.b16 %v475
        %v1143 = vunpack.c.l.b16 %v476
        %v1144 = vunpack.c.l.b16 %v477
        %v1145 = vunpack.c.l.b16 %v478
        %v1146 = vunpack.c.l.b16 %v479
        %v1147 = vunpack.c.l.b16 %v480
        %v1148 = vpack.c.b16 %v1141, %v1140
        %v1149 = vpack.c.b16 %v1143, %v1142
        %v1150 = vpack.c.b16 %v1145, %v1144
        %v1151 = vpack.c.b16 %v1147, %v1146
        %v1153 = vsel %vm653, %v1148, 0
        %v1156 = vsel %vm653, %v1149, 0
        %v1159 = vsel %vm653, %v1150, 0
        %v1162 = vsel %vm653, %v1151, 0
        %1164 = vmatprep.subr.bf16.mxu0 0
        %1165 = vmatpush1.bf16.msra.mxu0 0
        %1166 = vmatprep.subr.bf16.mxu0 0
        %1167 = vmatpush1.bf16.msra.mxu0 0
        %1168 = vmatprep.subr.bf16.mxu0 0
        %1169 = vmatpush1.bf16.msra.mxu0 0
        %1170 = vmatprep.subr.bf16.mxu0 0
        %1171 = vmatpush1.bf16.msra.mxu0 0
        %1172 = vmatprep.subr.bf16.mxu0 0
        %1173 = vmatpush1.bf16.msra.mxu0 %v1091
        %1174 = vmatprep.subr.bf16.mxu0 0
        %1175 = vmatpush1.bf16.msra.mxu0 %v1090
        %1176 = vmatprep.subr.bf16.mxu0 0
        %1177 = vmatpush1.bf16.msra.mxu0 %v1089
        %1178 = vmatprep.subr.bf16.mxu0 0
        %1179 = vmatpush1.bf16.msra.mxu0 %v1088
        %1180 = vmatprep.subr.bf16.mxu0 0
        %1181 = vmatpush2.bf16.msra.mxu0 0
        %1182 = vmatprep.subr.bf16.mxu0 0
        %1183 = vmatpush2.bf16.msra.mxu0 0
        %1184 = vmatprep.subr.bf16.mxu0 0
        %1185 = vmatpush2.bf16.msra.mxu0 0
        %1186 = vmatprep.subr.bf16.mxu0 0
        %1187 = vmatpush2.bf16.msra.mxu0 0
        %1188 = vmatprep.subr.bf16.mxu0 0
        %1189 = vmatpush2.bf16.msra.mxu0 0
        %1190 = vmatprep.subr.bf16.mxu0 0
        %1191 = vmatpush2.bf16.msra.mxu0 0
        %1192 = vmatprep.subr.bf16.mxu0 0
        %1193 = vmatpush2.bf16.msra.mxu0 0
        %1194 = vmatprep.subr.bf16.mxu0 0
        %1195 = vmatpush2.bf16.msra.mxu0 0
        %1196 = vmatprep.mubr.bf16.mxu0 0
        %1197 = vmatmul.mubr.bf16.gmra.mxu0 %v1153
        %v1198 = vpop.f32.mrf.mxu0
        %v1199 = vadd.f32 %v1095, %v1198
        %v1200 = vpop.f32.mrf.mxu0
        %v1201 = vpop.f32.mrf.mxu0
        %v1202 = vadd.f32 %v1100, %v1201
        %v1203 = vpop.f32.mrf.mxu0
        %1204 = vmatprep.mubr.bf16.mxu0 0
        %1205 = vmatmul.mubr.bf16.gmra.mxu0 %v1156
        %v1206 = vpop.f32.mrf.mxu0
        %v1207 = vadd.f32 %v1105, %v1206
        %v1208 = vpop.f32.mrf.mxu0
        %v1209 = vpop.f32.mrf.mxu0
        %v1210 = vadd.f32 %v1110, %v1209
        %v1211 = vpop.f32.mrf.mxu0
        %1212 = vmatprep.mubr.bf16.mxu0 0
        %1213 = vmatmul.mubr.bf16.gmra.mxu0 %v1159
        %v1214 = vpop.f32.mrf.mxu0
        %v1215 = vadd.f32 %v1115, %v1214
        %v1216 = vpop.f32.mrf.mxu0
        %v1217 = vpop.f32.mrf.mxu0
        %v1218 = vadd.f32 %v1120, %v1217
        %v1219 = vpop.f32.mrf.mxu0
        %1220 = vmatprep.mubr.bf16.mxu0 0
        %1221 = vmatmul.mubr.bf16.gmra.mxu0 %v1162
        %v1222 = vpop.f32.mrf.mxu0
        %v1223 = vadd.f32 %v1125, %v1222
        %v1224 = vpop.f32.mrf.mxu0
        %v1225 = vpop.f32.mrf.mxu0
        %v1226 = vadd.f32 %v1130, %v1225
        %v1227 = vpop.f32.mrf.mxu0
        %1228 = vdwg.mxu0
        %1229 = vst [vmem:[%s439] sm:$0xff] %v1199
        %1230 = vst [vmem:[%s439 + $0x8] sm:$0xff] %v1202
        %1231 = vst [vmem:[%s439 + $0x10] sm:$0xff] %v1207
        %1232 = vst [vmem:[%s439 + $0x18] sm:$0xff] %v1210
        %1233 = vst [vmem:[%s439 + $0x20] sm:$0xff] %v1215
        %1234 = vst [vmem:[%s439 + $0x28] sm:$0xff] %v1218
        %1235 = vst [vmem:[%s439 + $0x30] sm:$0xff] %v1223
        %1236 = vst [vmem:[%s439 + $0x38] sm:$0xff] %v1226
        %s1237 = sand.u32 %s226, 1
        %s1238 = scalar_lea.sflag [#allocation5], %s1237
        %s1239 = sand.u32 %s226, 1
        %s1240 = smul.addr %s1239, 64
        %s1241 = scalar_lea.vmem [#allocation4], %s1240
        // Predicated region
        $region129: #{tpu_custom_call.1} parent=119 // pred_check
          %p1242 = pneg %p236
        $region130: #{tpu_custom_call.1} parent=119 // pred_check_branch
          %1244 = sbr.rel (%p1242) target = $region132
        $region131: #{tpu_custom_call.1} parent=119 // pred_region
          %s1246 = ssub.s32 1024, 1024
          %1247 = vsyncadd %s1238, %s1246
          %s1248 = smul.addr %s26, 16
          %s1249 = sadd.s32 %s27, %s1248
          %s1250 = smul.addr %s1249, 128
          %s1251 = scalar_lea.hbm %s8, %s1250
          %s1252 = sshll.u32 %s1241, 4
          %s1253 = int_to_ptr.vmem [resolvable:$true] %s1252
          %1258 = dma.vmem_to_hbm [thread:$0]  %s1253, 1024, %s1251, %s1238, 128, 256, 8
        $region132: #{tpu_custom_call.1} parent=119 // pred_fallthru
          _
      $region120: #{tpu_custom_call.1} parent=5 // pred_fallthru
        _
      %p1259 = scmp.le.s32.totalorder 2, %s17
      // Predicated region
      $region133: #{tpu_custom_call.1} parent=5 // pred_check
        %p1260 = pneg %p1259
      $region134: #{tpu_custom_call.1} parent=5 // pred_check_branch
        %1262 = sbr.rel (%p1260) target = $region136
      $region135: #{tpu_custom_call.1} parent=5 // pred_region
        %s1263 = ssub.s32 %s17, 2
        // Predicated region
        $region137: #{tpu_custom_call.1} parent=135 // pred_check
          %p1264 = pneg %p242
        $region138: #{tpu_custom_call.1} parent=135 // pred_check_branch
          %1266 = sbr.rel (%p1264) target = $region140
        $region139: #{tpu_custom_call.1} parent=135 // pred_region
          %s1267 = sand.u32 %s227, 1
          %s1268 = scalar_lea.sflag [#allocation5], %s1267
          %s1269 = sand.u32 %s227, 1
          %s1270 = smul.addr %s1269, 64
          %s1271 = scalar_lea.vmem [#allocation4], %s1270
          %1272 = dma.done %s1268, 1024
        $region140: #{tpu_custom_call.1} parent=135 // pred_fallthru
          _
      $region136: #{tpu_custom_call.1} parent=5 // pred_fallthru
        _
    $region6: #{tpu_custom_call.1} parent=1 // loop_footer
      %s21 = sadd.s32 1, %s17
    $region7: #{tpu_custom_call.1} parent=1 // loop_footer_branch
      %16 = sbr.rel target = $region3
    $region8: #{tpu_custom_call.1} parent=1 // loop_exit
      _
    %1273 = vsyncpa [#allocation5], 1
    %s1274 = scalar_lea.sflag [#allocation5], 1
    %1275 = vsyncpa %s1274, 1

</llo_original>
